<compile_context>
chip_gen: v5e
topology: v5e:2x2
jax: 0.10.0
libtpu: 0.0.40
codegen_flags: <defaults>
</compile_context>

<pallas_src>
import numpy as np
import jax
import jax.numpy as jnp
from jax.experimental import pallas as pl
from jax.experimental.pallas import tpu as pltpu


# ----------------------------- Pallas kernel ------------------------------- #
def actor_mlp_kernel(x_ref, w1_ref, b1_ref, w2_ref, b2_ref, w3_ref, b3_ref,
                     mu_ref):
    # x: (TB, S) f32; weights bf16; biases f32 shaped (1, H) / (1, A_pad).
    x = x_ref[...].astype(jnp.bfloat16)
    h1 = jnp.dot(x, w1_ref[...], preferred_element_type=jnp.float32)      # (TB, H)
    h1 = jnp.maximum(h1 + b1_ref[...], 0.0)
    h2 = jnp.dot(h1.astype(jnp.bfloat16), w2_ref[...],
                 preferred_element_type=jnp.float32)                      # (TB, H)
    h2 = jnp.maximum(h2 + b2_ref[...], 0.0)
    mu = jnp.dot(h2.astype(jnp.bfloat16), w3_ref[...],
                 preferred_element_type=jnp.float32)                      # (TB, A_pad)
    mu_ref[...] = jnp.tanh(mu + b3_ref[...]).astype(mu_ref.dtype)


# ------------------------------- wrapper ------------------------------------ #
def _round_up(x, m):
    return ((x + m - 1) // m) * m


def actor_forward_pallas(state, params, block_b=512):
    """Runs the fused, batch-tiled Actor MLP on TPU. Returns (mu, log_std)."""
    w1, b1, w2, b2, w3, b3, log_std = params
    B, S = state.shape
    H = w1.shape[1]
    A = w3.shape[1]

    # bf16 weights (DMA / MXU win); biases stay f32 and are added post-matmul.
    w1b = w1.astype(jnp.bfloat16)
    w2b = w2.astype(jnp.bfloat16)

    # Lane-dense output: pad mu head to a multiple of 128 lanes, slice later.
    A_pad = _round_up(A, 128)
    w3b = jnp.zeros((H, A_pad), jnp.bfloat16).at[:, :A].set(w3.astype(jnp.bfloat16))
    b3p = jnp.zeros((1, A_pad), jnp.float32).at[0, :A].set(b3)

    # Batch tile: multiple of 8 sublanes; pad B so the grid divides evenly.
    TB = min(block_b, _round_up(B, 8))
    B_pad = _round_up(B, TB)
    state_p = state
    if B_pad != B:
        state_p = jnp.zeros((B_pad, S), state.dtype).at[:B].set(state)

    grid = (pl.cdiv(B_pad, TB),)
    mu_pad = pl.pallas_call(
        actor_mlp_kernel,
        out_shape=jax.ShapeDtypeStruct((B_pad, A_pad), jnp.float32),
        grid=grid,
        in_specs=[
            pl.BlockSpec((TB, S), lambda i: (i, 0)),       # state: tiled over batch
            pl.BlockSpec((S, H), lambda i: (0, 0)),        # w1: pinned in VMEM
            pl.BlockSpec((1, H), lambda i: (0, 0)),        # b1: pinned
            pl.BlockSpec((H, H), lambda i: (0, 0)),        # w2: pinned
            pl.BlockSpec((1, H), lambda i: (0, 0)),        # b2: pinned
            pl.BlockSpec((H, A_pad), lambda i: (0, 0)),    # w3 (lane-padded): pinned
            pl.BlockSpec((1, A_pad), lambda i: (0, 0)),    # b3 (lane-padded): pinned
        ],
        out_specs=pl.BlockSpec((TB, A_pad), lambda i: (i, 0)),
        compiler_params=pltpu.CompilerParams(
            dimension_semantics=("parallel",),             # megacore split on v7x
        ),
    )(state_p, w1b, b1[None, :], w2b, b2[None, :], w3b, b3p)

    return mu_pad[:B, :A], log_std


# --------------------------- parameter creation ----------------------------- #
def _orthogonal(key, out_features, in_features, gain):
    """Deterministic orthogonal init matching torch.nn.init.orthogonal_ semantics."""
    rows, cols = out_features, in_features
    flat = jax.random.normal(key, (max(rows, cols), min(rows, cols)),
                             dtype=jnp.float32)
    q, r = jnp.linalg.qr(flat)
    d = jnp.diag(r)
    q = q * jnp.where(d == 0, 1.0, jnp.sign(d))   # make decomposition unique
    if rows < cols:
        q = q.T
    return gain * q[:rows, :cols]                 # (out_features, in_features)


def make_actor_params(key, state_dim, action_dim, hidden_dim=256, std_init=0.5):
    k1, k2, k3 = jax.random.split(key, 3)
    gain = float(np.sqrt(2.0))
    # PyTorch Linear weight is (out, in); store transposed as (in, out).
    w1 = _orthogonal(k1, hidden_dim, state_dim, gain).T
    b1 = jnp.zeros((hidden_dim,), jnp.float32)
    w2 = _orthogonal(k2, hidden_dim, hidden_dim, gain).T
    b2 = jnp.zeros((hidden_dim,), jnp.float32)
    w3 = _orthogonal(k3, action_dim, hidden_dim, 0.01).T
    b3 = jnp.zeros((action_dim,), jnp.float32)
    log_std = jnp.ones((action_dim,), jnp.float32) * float(np.log(std_init))
    return (w1, b1, w2, b2, w3, b3, log_std)


# ------------------------------ references ---------------------------------- #
def actor_forward_ref_bf16(state, params):
    """Mirrors the kernel arithmetic (bf16 weights, f32 accumulation)."""
    w1, b1, w2, b2, w3, b3, log_std = params
    bf = jnp.bfloat16
    h1 = jnp.maximum(jnp.dot(state.astype(bf), w1.astype(bf),
                             preferred_element_type=jnp.float32) + b1, 0.0)
    h2 = jnp.maximum(jnp.dot(h1.astype(bf), w2.astype(bf),
                             preferred_element_type=jnp.float32) + b2, 0.0)
    mu = jnp.tanh(jnp.dot(h2.astype(bf), w3.astype(bf),
                          preferred_element_type=jnp.float32) + b3)
    return mu, log_std


def actor_forward_ref_f32(state, params):
    w1, b1, w2, b2, w3, b3, log_std = params
    h1 = jnp.maximum(state @ w1 + b1, 0.0)
    h2 = jnp.maximum(h1 @ w2 + b2, 0.0)
    mu = jnp.tanh(h2 @ w3 + b3)
    return mu, log_std


if __name__ == "__main__":
    key = jax.random.PRNGKey(0)
    k_state, k_big, k_params = jax.random.split(key, 3)

    STATE_DIM, ACTION_DIM, HIDDEN = 8, 4, 256
    params = make_actor_params(k_params, STATE_DIM, ACTION_DIM, HIDDEN)

    # --- small batch (typical env-step shape; exercises batch padding) ------ #
    B = 4
    state = jax.random.normal(k_state, (B, STATE_DIM), dtype=jnp.float32)
    mu, log_std = actor_forward_pallas(state, params)
    jax.block_until_ready(mu)
    jax.block_until_ready(log_std)

    mu_ref, log_std_ref = actor_forward_ref_bf16(state, params)
    np.testing.assert_allclose(np.asarray(mu), np.asarray(mu_ref),
                               rtol=1e-5, atol=1e-5)
    mu_f32, _ = actor_forward_ref_f32(state, params)
    np.testing.assert_allclose(np.asarray(mu), np.asarray(mu_f32),
                               rtol=1e-2, atol=2e-3)   # bf16-weight fidelity
    np.testing.assert_allclose(np.asarray(log_std), np.asarray(log_std_ref))

    # --- large batch (exercises the multi-tile pipelined grid + padding) ---- #
    BIG = 1000
    state_big = jax.random.normal(k_big, (BIG, STATE_DIM), dtype=jnp.float32)
    mu_big, _ = actor_forward_pallas(state_big, params)
    jax.block_until_ready(mu_big)
    mu_big_ref, _ = actor_forward_ref_bf16(state_big, params)
    np.testing.assert_allclose(np.asarray(mu_big), np.asarray(mu_big_ref),
                               rtol=1e-5, atol=1e-5)

    print("KERNEL_OK")
</pallas_src>

<mosaic_0001>
module attributes {stable_mosaic.version = 11 : i64} {
  func.func @actor_mlp_kernel(%arg0: i32, %arg1: memref<8x8xf32, #tpu.memory_space<vmem>>, %arg2: memref<8x256xbf16, #tpu.memory_space<vmem>>, %arg3: memref<1x256xf32, #tpu.memory_space<vmem>>, %arg4: memref<256x256xbf16, #tpu.memory_space<vmem>>, %arg5: memref<1x256xf32, #tpu.memory_space<vmem>>, %arg6: memref<256x128xbf16, #tpu.memory_space<vmem>>, %arg7: memref<1x128xf32, #tpu.memory_space<vmem>>, %arg8: memref<8x128xf32, #tpu.memory_space<vmem>>) attributes {dimension_semantics = [#tpu.dimension_semantics<parallel>], iteration_bounds = array<i64: 1>, scalar_prefetch = 0 : i64, scratch_operands = 0 : i64, tpu.core_type = #tpu.core_type<tc>, window_params = [{transform_indices = @transform_0, window_bounds = array<i64: 8, 8>}, {pipeline_mode = #tpu.pipeline_mode<synchronous>, transform_indices = @transform_1, window_bounds = array<i64: 8, 256>}, {pipeline_mode = #tpu.pipeline_mode<synchronous>, transform_indices = @transform_2, window_bounds = array<i64: 1, 256>}, {pipeline_mode = #tpu.pipeline_mode<synchronous>, transform_indices = @transform_3, window_bounds = array<i64: 256, 256>}, {pipeline_mode = #tpu.pipeline_mode<synchronous>, transform_indices = @transform_4, window_bounds = array<i64: 1, 256>}, {pipeline_mode = #tpu.pipeline_mode<synchronous>, transform_indices = @transform_5, window_bounds = array<i64: 256, 128>}, {pipeline_mode = #tpu.pipeline_mode<synchronous>, transform_indices = @transform_6, window_bounds = array<i64: 1, 128>}, {transform_indices = @transform_7, window_bounds = array<i64: 8, 128>}]} {
    %c0 = arith.constant 0 : index
    %c0_0 = arith.constant 0 : index
    %0 = vector.load %arg1[%c0, %c0_0] : memref<8x8xf32, #tpu.memory_space<vmem>>, vector<8x8xf32>
    %1 = arith.truncf %0 : vector<8x8xf32> to vector<8x8xbf16>
    %c0_1 = arith.constant 0 : index
    %c0_2 = arith.constant 0 : index
    %2 = vector.load %arg2[%c0_1, %c0_2] : memref<8x256xbf16, #tpu.memory_space<vmem>>, vector<8x256xbf16>
    %cst = arith.constant dense<0.000000e+00> : vector<8x256xf32>
    %3 = tpu.matmul %1, %2, %cst {dimension_numbers = #tpu.dot_dimension_numbers<[1], [0], [0], [1], [0, 0, 1, 1], [], []>} : vector<8x8xbf16>, vector<8x256xbf16>, vector<8x256xf32> -> vector<8x256xf32>
    %c0_3 = arith.constant 0 : index
    %c0_4 = arith.constant 0 : index
    %4 = vector.load %arg3[%c0_3, %c0_4] : memref<1x256xf32, #tpu.memory_space<vmem>>, vector<1x256xf32>
    %5 = vector.broadcast %4 : vector<1x256xf32> to vector<8x256xf32>
    %6 = arith.addf %3, %5 : vector<8x256xf32>
    %cst_5 = arith.constant 0.000000e+00 : f32
    %7 = vector.broadcast %cst_5 : f32 to vector<8x256xf32>
    %8 = arith.maximumf %6, %7 : vector<8x256xf32>
    %9 = arith.truncf %8 : vector<8x256xf32> to vector<8x256xbf16>
    %c0_6 = arith.constant 0 : index
    %c0_7 = arith.constant 0 : index
    %10 = vector.load %arg4[%c0_6, %c0_7] : memref<256x256xbf16, #tpu.memory_space<vmem>>, vector<256x256xbf16>
    %cst_8 = arith.constant dense<0.000000e+00> : vector<8x256xf32>
    %11 = tpu.matmul %9, %10, %cst_8 {dimension_numbers = #tpu.dot_dimension_numbers<[1], [0], [0], [1], [0, 0, 1, 1], [], []>} : vector<8x256xbf16>, vector<256x256xbf16>, vector<8x256xf32> -> vector<8x256xf32>
    %c0_9 = arith.constant 0 : index
    %c0_10 = arith.constant 0 : index
    %12 = vector.load %arg5[%c0_9, %c0_10] : memref<1x256xf32, #tpu.memory_space<vmem>>, vector<1x256xf32>
    %13 = vector.broadcast %12 : vector<1x256xf32> to vector<8x256xf32>
    %14 = arith.addf %11, %13 : vector<8x256xf32>
    %cst_11 = arith.constant 0.000000e+00 : f32
    %15 = vector.broadcast %cst_11 : f32 to vector<8x256xf32>
    %16 = arith.maximumf %14, %15 : vector<8x256xf32>
    %17 = arith.truncf %16 : vector<8x256xf32> to vector<8x256xbf16>
    %c0_12 = arith.constant 0 : index
    %c0_13 = arith.constant 0 : index
    %18 = vector.load %arg6[%c0_12, %c0_13] : memref<256x128xbf16, #tpu.memory_space<vmem>>, vector<256x128xbf16>
    %cst_14 = arith.constant dense<0.000000e+00> : vector<8x128xf32>
    %19 = tpu.matmul %17, %18, %cst_14 {dimension_numbers = #tpu.dot_dimension_numbers<[1], [0], [0], [1], [0, 0, 1, 1], [], []>} : vector<8x256xbf16>, vector<256x128xbf16>, vector<8x128xf32> -> vector<8x128xf32>
    %c0_15 = arith.constant 0 : index
    %c0_16 = arith.constant 0 : index
    %20 = vector.load %arg7[%c0_15, %c0_16] : memref<1x128xf32, #tpu.memory_space<vmem>>, vector<1x128xf32>
    %21 = vector.broadcast %20 : vector<1x128xf32> to vector<8x128xf32>
    %22 = arith.addf %19, %21 : vector<8x128xf32>
    %23 = math.tanh %22 : vector<8x128xf32>
    %c0_17 = arith.constant 0 : index
    %c0_18 = arith.constant 0 : index
    %24 = vector.load %arg8[%c0_17, %c0_18] : memref<8x128xf32, #tpu.memory_space<vmem>>, vector<8x128xf32>
    tpu.vector_store %arg8[%c0_17, %c0_18], %23 {strides = array<i32>} : memref<8x128xf32, #tpu.memory_space<vmem>>, vector<8x128xf32>,
    return
  }
  func.func @transform_0(%arg0: i32) -> (i32, i32) {
    %c0_i32 = arith.constant 0 : i32
    %c0_i32_0 = arith.constant 0 : i32
    return %arg0, %c0_i32 : i32, i32
  }
  func.func @transform_1(%arg0: i32) -> (i32, i32) {
    %c0_i32 = arith.constant 0 : i32
    %c0_i32_0 = arith.constant 0 : i32
    %c0_i32_1 = arith.constant 0 : i32
    return %c0_i32, %c0_i32_0 : i32, i32
  }
  func.func @transform_2(%arg0: i32) -> (i32, i32) {
    %c0_i32 = arith.constant 0 : i32
    %c0_i32_0 = arith.constant 0 : i32
    %c0_i32_1 = arith.constant 0 : i32
    return %c0_i32, %c0_i32_0 : i32, i32
  }
  func.func @transform_3(%arg0: i32) -> (i32, i32) {
    %c0_i32 = arith.constant 0 : i32
    %c0_i32_0 = arith.constant 0 : i32
    %c0_i32_1 = arith.constant 0 : i32
    return %c0_i32, %c0_i32_0 : i32, i32
  }
  func.func @transform_4(%arg0: i32) -> (i32, i32) {
    %c0_i32 = arith.constant 0 : i32
    %c0_i32_0 = arith.constant 0 : i32
    %c0_i32_1 = arith.constant 0 : i32
    return %c0_i32, %c0_i32_0 : i32, i32
  }
  func.func @transform_5(%arg0: i32) -> (i32, i32) {
    %c0_i32 = arith.constant 0 : i32
    %c0_i32_0 = arith.constant 0 : i32
    %c0_i32_1 = arith.constant 0 : i32
    return %c0_i32, %c0_i32_0 : i32, i32
  }
  func.func @transform_6(%arg0: i32) -> (i32, i32) {
    %c0_i32 = arith.constant 0 : i32
    %c0_i32_0 = arith.constant 0 : i32
    %c0_i32_1 = arith.constant 0 : i32
    return %c0_i32, %c0_i32_0 : i32, i32
  }
  func.func @transform_7(%arg0: i32) -> (i32, i32) {
    %c0_i32 = arith.constant 0 : i32
    %c0_i32_0 = arith.constant 0 : i32
    return %arg0, %c0_i32 : i32, i32
  }
}

</mosaic_0001>

<llo_original>
// kernel: tpu_custom_call.1
$region0: #{tpu_custom_call.1}
  #allocation0 [shape = 'u32[]', space=smem, size = 0x4, offset = 0x4, fixed_abs, tag = 'smem constant byte address 0x4 - core index']
  #allocation1 [shape = 'u32[72,128]{1,0:T(1,128)}', space=vmem, size = 0x9000, scoped, tag = 'internal scratch']
  %s0 = inlined_call_operand.hbm [shape: f32[8,8], index: 0, kind: input, shape index: {}]
  %s1 = inlined_call_operand.hbm [shape: bf16[8,256], index: 1, kind: input, shape index: {}]
  %s2 = inlined_call_operand.hbm [shape: f32[1,256], index: 2, kind: input, shape index: {}]
  %s3 = inlined_call_operand.hbm [shape: bf16[256,256], index: 3, kind: input, shape index: {}]
  %s4 = inlined_call_operand.vmem [shape: f32[1,256], index: 4, kind: input, shape index: {}]
  %s5 = inlined_call_operand.hbm [shape: bf16[256,128], index: 5, kind: input, shape index: {}]
  %s6 = inlined_call_operand.vmem [shape: f32[1,128], index: 6, kind: input, shape index: {}]
  %s7 = inlined_call_operand.hbm [shape: f32[8,128], index: 7, kind: output, shape index: {}]
  %s8 = sld [smem:[#allocation0]]
  $region58: #{tpu_custom_call.1} parent=0
    _
  %s10 = ssub.s32 1, %s8
  %s11 = scalar_select 0, %s10, %s8
  $region1: #{tpu_custom_call.1} parent=0
    #allocation2 [shape = 'u8[4096]{0}', space=vmem, size = 0x1000, scoped, tag = 'input window, operand 0, single buffered']
    #allocation3 [shape = 's32[1]{0}', space=sflag, size = 0x4, scoped, tag = 'scoped memory for tpu_custom_call.1']
    #allocation4 [shape = 's32[1]{0}', space=sflag, size = 0x4, scoped, tag = 'scoped memory for tpu_custom_call.1']
    #allocation5 [shape = 'u8[4096]{0}', space=vmem, size = 0x1000, scoped, tag = 'input window, operand 1, single buffered']
    #allocation6 [shape = 's32[1]{0}', space=sflag, size = 0x4, scoped, tag = 'scoped memory for tpu_custom_call.1']
    #allocation7 [shape = 'u8[1024]{0}', space=vmem, size = 0x400, scoped, tag = 'input window, operand 2, single buffered']
    #allocation8 [shape = 'u8[131072]{0}', space=vmem, size = 0x20000, scoped, tag = 'input window, operand 3, single buffered']
    #allocation9 [shape = 's32[1]{0}', space=sflag, size = 0x4, scoped, tag = 'scoped memory for tpu_custom_call.1']
    #allocation10 [shape = 'u8[65536]{0}', space=vmem, size = 0x10000, scoped, tag = 'input window, operand 5, single buffered']
    #allocation11 [shape = 'u8[4096]{0}', space=vmem, size = 0x1000, scoped, tag = 'output window, operand 0, single buffered']
    %12 = vsyncpa [#allocation3], 0
    %13 = vsyncpa [#allocation6], 0
    %14 = vsyncpa [#allocation9], 0
    %15 = vsyncpa [#allocation4], 0
    // Predicated region
    $region2: #{tpu_custom_call.1} parent=1 // pred_check
      _
    $region3: #{tpu_custom_call.1} parent=1 // pred_check_branch
      %17 = sbr.rel (0) target = $region5
    $region4: #{tpu_custom_call.1} parent=1 // pred_region
      %19 = vsyncadd [#allocation3], 0
      %s21 = sshll.u32 %s0, 4
      %s22 = int_to_ptr.hbm [resolvable:$true] %s21
      %s23 = sshll.u32 [#allocation2], 4
      %s24 = int_to_ptr.vmem [resolvable:$true] %s23
      %26 = dma.hbm_to_vmem [thread:$0]  %s22, 128, %s24, [#allocation3]
    $region5: #{tpu_custom_call.1} parent=1 // pred_fallthru
      _
    // Predicated region
    $region6: #{tpu_custom_call.1} parent=1 // pred_check
      _
    $region7: #{tpu_custom_call.1} parent=1 // pred_check_branch
      %28 = sbr.rel (0) target = $region9
    $region8: #{tpu_custom_call.1} parent=1 // pred_region
      %30 = vsyncadd [#allocation6], 0
      %s32 = sshll.u32 %s1, 4
      %s33 = int_to_ptr.hbm [resolvable:$true] %s32
      %s34 = sshll.u32 [#allocation5], 4
      %s35 = int_to_ptr.vmem [resolvable:$true] %s34
      %37 = dma.hbm_to_vmem [thread:$0]  %s33, 128, %s35, [#allocation6]
    $region9: #{tpu_custom_call.1} parent=1 // pred_fallthru
      _
    // Predicated region
    $region10: #{tpu_custom_call.1} parent=1 // pred_check
      _
    $region11: #{tpu_custom_call.1} parent=1 // pred_check_branch
      %39 = sbr.rel (0) target = $region13
    $region12: #{tpu_custom_call.1} parent=1 // pred_region
      %41 = vsyncadd [#allocation6], 0
      %s43 = sshll.u32 %s2, 4
      %s44 = int_to_ptr.hbm [resolvable:$true] %s43
      %s45 = sshll.u32 [#allocation7], 4
      %s46 = int_to_ptr.vmem [resolvable:$true] %s45
      %48 = dma.hbm_to_vmem [thread:$0]  %s44, 32, %s46, [#allocation6]
    $region13: #{tpu_custom_call.1} parent=1 // pred_fallthru
      _
    // Predicated region
    $region14: #{tpu_custom_call.1} parent=1 // pred_check
      _
    $region15: #{tpu_custom_call.1} parent=1 // pred_check_branch
      %50 = sbr.rel (0) target = $region17
    $region16: #{tpu_custom_call.1} parent=1 // pred_region
      %52 = vsyncadd [#allocation9], 0
      %s53 = sshll.u32 %s3, 4
      %s54 = int_to_ptr.hbm [resolvable:$true] %s53
      %s55 = sshll.u32 [#allocation8], 4
      %s56 = int_to_ptr.vmem [resolvable:$true] %s55
      %61 = dma.hbm_to_vmem [thread:$0]  %s54, 4096, %s56, [#allocation9], 128, 128, 8
    $region17: #{tpu_custom_call.1} parent=1 // pred_fallthru
      _
    // Predicated region
    $region18: #{tpu_custom_call.1} parent=1 // pred_check
      _
    $region19: #{tpu_custom_call.1} parent=1 // pred_check_branch
      %63 = sbr.rel (0) target = $region21
    $region20: #{tpu_custom_call.1} parent=1 // pred_region
      _
    $region21: #{tpu_custom_call.1} parent=1 // pred_fallthru
      _
    // Predicated region
    $region22: #{tpu_custom_call.1} parent=1 // pred_check
      _
    $region23: #{tpu_custom_call.1} parent=1 // pred_check_branch
      %65 = sbr.rel (0) target = $region25
    $region24: #{tpu_custom_call.1} parent=1 // pred_region
      %67 = vsyncadd [#allocation9], 0
      %s68 = sshll.u32 %s5, 4
      %s69 = int_to_ptr.hbm [resolvable:$true] %s68
      %s70 = sshll.u32 [#allocation10], 4
      %s71 = int_to_ptr.vmem [resolvable:$true] %s70
      %76 = dma.hbm_to_vmem [thread:$0]  %s69, 2048, %s71, [#allocation9], 64, 64, 4
    $region25: #{tpu_custom_call.1} parent=1 // pred_fallthru
      _
    // Predicated region
    $region26: #{tpu_custom_call.1} parent=1 // pred_check
      _
    $region27: #{tpu_custom_call.1} parent=1 // pred_check_branch
      %78 = sbr.rel (0) target = $region29
    $region28: #{tpu_custom_call.1} parent=1 // pred_region
      _
    $region29: #{tpu_custom_call.1} parent=1 // pred_fallthru
      _
    // Predicated region
    $region30: #{tpu_custom_call.1} parent=1 // pred_check
      _
    $region31: #{tpu_custom_call.1} parent=1 // pred_check_branch
      %80 = sbr.rel (0) target = $region33
    $region32: #{tpu_custom_call.1} parent=1 // pred_region
      %82 = dma.done [#allocation3], 128
    $region33: #{tpu_custom_call.1} parent=1 // pred_fallthru
      _
    // Predicated region
    $region34: #{tpu_custom_call.1} parent=1 // pred_check
      _
    $region35: #{tpu_custom_call.1} parent=1 // pred_check_branch
      %84 = sbr.rel (0) target = $region37
    $region36: #{tpu_custom_call.1} parent=1 // pred_region
      %86 = dma.done [#allocation6], 128
    $region37: #{tpu_custom_call.1} parent=1 // pred_fallthru
      _
    // Predicated region
    $region38: #{tpu_custom_call.1} parent=1 // pred_check
      _
    $region39: #{tpu_custom_call.1} parent=1 // pred_check_branch
      %88 = sbr.rel (0) target = $region41
    $region40: #{tpu_custom_call.1} parent=1 // pred_region
      %90 = dma.done [#allocation6], 32
    $region41: #{tpu_custom_call.1} parent=1 // pred_fallthru
      _
    // Predicated region
    $region42: #{tpu_custom_call.1} parent=1 // pred_check
      _
    $region43: #{tpu_custom_call.1} parent=1 // pred_check_branch
      %92 = sbr.rel (0) target = $region45
    $region44: #{tpu_custom_call.1} parent=1 // pred_region
      %94 = dma.done [#allocation9], 4096
    $region45: #{tpu_custom_call.1} parent=1 // pred_fallthru
      _
    // Predicated region
    $region46: #{tpu_custom_call.1} parent=1 // pred_check
      _
    $region47: #{tpu_custom_call.1} parent=1 // pred_check_branch
      %96 = sbr.rel (0) target = $region49
    $region48: #{tpu_custom_call.1} parent=1 // pred_region
      %98 = dma.done [#allocation9], 2048
    $region49: #{tpu_custom_call.1} parent=1 // pred_fallthru
      _
    %v100 = vld [vmem:[#allocation2] sm:$0xff]
    %v101 = vpack.c.bf16 %v100, %v100
    %v102 = vld [vmem:[#allocation5] sm:$0xff]
    %v103 = vld [vmem:[#allocation7] sm:$0x3]
    %v105 = vperm.slane %v103, 0
    %v106 = vperm.slane %v103, 1
    %v110 = vunpack.c.l.b16 %v102
    %v111 = vunpack.c.h.b16 %v102
    %v112 = vpack.c.b16 %v110, %v110
    %v113 = vpack.c.b16 %v111, %v111
    %vm114 = vcmask 64512
    %v116 = vsel %vm114, %v101, 0
    %vm118 = vcmask 1043456
    %v120 = vsel %vm118, %v112, 0
    %v123 = vsel %vm118, %v113, 0
    %125 = vmatpush.bf16.msra.mxu0 0
    %126 = vmatpush.bf16.msra.mxu0 0
    %127 = vmatpush.bf16.msra.mxu0 0
    %128 = vmatpush.bf16.msra.mxu0 0
    %129 = vmatpush.bf16.msra.mxu0 0
    %130 = vmatpush.bf16.msra.mxu0 0
    %131 = vmatpush.bf16.msra.mxu0 0
    %132 = vmatpush.bf16.msra.mxu0 %v120
    %133 = vmatmul.bf16.gmra.mxu0 %v116
    %v134 = vpop.f32.mrf.mxu0
    %v135 = vadd.f32 %v105, %v134
    %v136 = vpop.f32.mrf.mxu0
    %137 = vdwg.mxu0
    %138 = vmatpush.bf16.msra.mxu0 0
    %139 = vmatpush.bf16.msra.mxu0 0
    %140 = vmatpush.bf16.msra.mxu0 0
    %141 = vmatpush.bf16.msra.mxu0 0
    %142 = vmatpush.bf16.msra.mxu0 0
    %143 = vmatpush.bf16.msra.mxu0 0
    %144 = vmatpush.bf16.msra.mxu0 0
    %145 = vmatpush.bf16.msra.mxu0 %v123
    %146 = vmatmul.bf16.gmra.mxu0 %v116
    %v147 = vpop.f32.mrf.mxu0
    %v148 = vadd.f32 %v106, %v147
    %v149 = vpop.f32.mrf.mxu0
    %150 = vdwg.mxu0
    %v151 = vmax.f32 %v135, 0.0
    %v152 = vmax.f32 %v148, 0.0
    %v153 = vpack.c.bf16 %v151, %v151
    %v154 = vpack.c.bf16 %v152, %v152
    %v155 = vld [vmem:[#allocation8] sm:$0xff]
    %v156 = vld [vmem:[#allocation8 + $0x8] sm:$0xff]
    %v157 = vld [vmem:[#allocation8 + $0x10] sm:$0xff]
    %v158 = vld [vmem:[#allocation8 + $0x18] sm:$0xff]
    %v159 = vld [vmem:[#allocation8 + $0x20] sm:$0xff]
    %v160 = vld [vmem:[#allocation8 + $0x28] sm:$0xff]
    %v161 = vld [vmem:[#allocation8 + $0x30] sm:$0xff]
    %v162 = vld [vmem:[#allocation8 + $0x38] sm:$0xff]
    %v163 = vld [vmem:[#allocation8 + $0x40] sm:$0xff]
    %v164 = vld [vmem:[#allocation8 + $0x48] sm:$0xff]
    %v165 = vld [vmem:[#allocation8 + $0x50] sm:$0xff]
    %v166 = vld [vmem:[#allocation8 + $0x58] sm:$0xff]
    %v167 = vld [vmem:[#allocation8 + $0x60] sm:$0xff]
    %v168 = vld [vmem:[#allocation8 + $0x68] sm:$0xff]
    %v169 = vld [vmem:[#allocation8 + $0x70] sm:$0xff]
    %v170 = vld [vmem:[#allocation8 + $0x78] sm:$0xff]
    %v171 = vld [vmem:[#allocation8 + $0x80] sm:$0xff]
    %v172 = vld [vmem:[#allocation8 + $0x88] sm:$0xff]
    %v173 = vld [vmem:[#allocation8 + $0x90] sm:$0xff]
    %v174 = vld [vmem:[#allocation8 + $0x98] sm:$0xff]
    %v175 = vld [vmem:[#allocation8 + $0xa0] sm:$0xff]
    %v176 = vld [vmem:[#allocation8 + $0xa8] sm:$0xff]
    %v177 = vld [vmem:[#allocation8 + $0xb0] sm:$0xff]
    %v178 = vld [vmem:[#allocation8 + $0xb8] sm:$0xff]
    %v179 = vld [vmem:[#allocation8 + $0xc0] sm:$0xff]
    %v180 = vld [vmem:[#allocation8 + $0xc8] sm:$0xff]
    %v181 = vld [vmem:[#allocation8 + $0xd0] sm:$0xff]
    %v182 = vld [vmem:[#allocation8 + $0xd8] sm:$0xff]
    %v183 = vld [vmem:[#allocation8 + $0xe0] sm:$0xff]
    %v184 = vld [vmem:[#allocation8 + $0xe8] sm:$0xff]
    %v185 = vld [vmem:[#allocation8 + $0xf0] sm:$0xff]
    %v186 = vld [vmem:[#allocation8 + $0xf8] sm:$0xff]
    %v187 = vld [vmem:[%s4] sm:$0x3]
    %v189 = vperm.slane %v187, 0
    %v190 = vperm.slane %v187, 1
    %v225 = vunpack.c.l.b16 %v155
    %v226 = vunpack.c.h.b16 %v155
    %v227 = vunpack.c.l.b16 %v156
    %v228 = vunpack.c.h.b16 %v156
    %v229 = vunpack.c.l.b16 %v157
    %v230 = vunpack.c.h.b16 %v157
    %v231 = vunpack.c.l.b16 %v158
    %v232 = vunpack.c.h.b16 %v158
    %v233 = vunpack.c.l.b16 %v159
    %v234 = vunpack.c.h.b16 %v159
    %v235 = vunpack.c.l.b16 %v160
    %v236 = vunpack.c.h.b16 %v160
    %v237 = vunpack.c.l.b16 %v161
    %v238 = vunpack.c.h.b16 %v161
    %v239 = vunpack.c.l.b16 %v162
    %v240 = vunpack.c.h.b16 %v162
    %v241 = vunpack.c.l.b16 %v163
    %v242 = vunpack.c.h.b16 %v163
    %v243 = vunpack.c.l.b16 %v164
    %v244 = vunpack.c.h.b16 %v164
    %v245 = vunpack.c.l.b16 %v165
    %v246 = vunpack.c.h.b16 %v165
    %v247 = vunpack.c.l.b16 %v166
    %v248 = vunpack.c.h.b16 %v166
    %v249 = vunpack.c.l.b16 %v167
    %v250 = vunpack.c.h.b16 %v167
    %v251 = vunpack.c.l.b16 %v168
    %v252 = vunpack.c.h.b16 %v168
    %v253 = vunpack.c.l.b16 %v169
    %v254 = vunpack.c.h.b16 %v169
    %v255 = vunpack.c.l.b16 %v170
    %v256 = vunpack.c.h.b16 %v170
    %v257 = vunpack.c.l.b16 %v171
    %v258 = vunpack.c.h.b16 %v171
    %v259 = vunpack.c.l.b16 %v172
    %v260 = vunpack.c.h.b16 %v172
    %v261 = vunpack.c.l.b16 %v173
    %v262 = vunpack.c.h.b16 %v173
    %v263 = vunpack.c.l.b16 %v174
    %v264 = vunpack.c.h.b16 %v174
    %v265 = vunpack.c.l.b16 %v175
    %v266 = vunpack.c.h.b16 %v175
    %v267 = vunpack.c.l.b16 %v176
    %v268 = vunpack.c.h.b16 %v176
    %v269 = vunpack.c.l.b16 %v177
    %v270 = vunpack.c.h.b16 %v177
    %v271 = vunpack.c.l.b16 %v178
    %v272 = vunpack.c.h.b16 %v178
    %v273 = vunpack.c.l.b16 %v179
    %v274 = vunpack.c.h.b16 %v179
    %v275 = vunpack.c.l.b16 %v180
    %v276 = vunpack.c.h.b16 %v180
    %v277 = vunpack.c.l.b16 %v181
    %v278 = vunpack.c.h.b16 %v181
    %v279 = vunpack.c.l.b16 %v182
    %v280 = vunpack.c.h.b16 %v182
    %v281 = vunpack.c.l.b16 %v183
    %v282 = vunpack.c.h.b16 %v183
    %v283 = vunpack.c.l.b16 %v184
    %v284 = vunpack.c.h.b16 %v184
    %v285 = vunpack.c.l.b16 %v185
    %v286 = vunpack.c.h.b16 %v185
    %v287 = vunpack.c.l.b16 %v186
    %v288 = vunpack.c.h.b16 %v186
    %v289 = vpack.c.b16 %v227, %v225
    %v290 = vpack.c.b16 %v228, %v226
    %v291 = vpack.c.b16 %v231, %v229
    %v292 = vpack.c.b16 %v232, %v230
    %v293 = vpack.c.b16 %v235, %v233
    %v294 = vpack.c.b16 %v236, %v234
    %v295 = vpack.c.b16 %v239, %v237
    %v296 = vpack.c.b16 %v240, %v238
    %v297 = vpack.c.b16 %v243, %v241
    %v298 = vpack.c.b16 %v244, %v242
    %v299 = vpack.c.b16 %v247, %v245
    %v300 = vpack.c.b16 %v248, %v246
    %v301 = vpack.c.b16 %v251, %v249
    %v302 = vpack.c.b16 %v252, %v250
    %v303 = vpack.c.b16 %v255, %v253
    %v304 = vpack.c.b16 %v256, %v254
    %v305 = vpack.c.b16 %v259, %v257
    %v306 = vpack.c.b16 %v260, %v258
    %v307 = vpack.c.b16 %v263, %v261
    %v308 = vpack.c.b16 %v264, %v262
    %v309 = vpack.c.b16 %v267, %v265
    %v310 = vpack.c.b16 %v268, %v266
    %v311 = vpack.c.b16 %v271, %v269
    %v312 = vpack.c.b16 %v272, %v270
    %v313 = vpack.c.b16 %v275, %v273
    %v314 = vpack.c.b16 %v276, %v274
    %v315 = vpack.c.b16 %v279, %v277
    %v316 = vpack.c.b16 %v280, %v278
    %v317 = vpack.c.b16 %v283, %v281
    %v318 = vpack.c.b16 %v284, %v282
    %v319 = vpack.c.b16 %v287, %v285
    %v320 = vpack.c.b16 %v288, %v286
    %353 = vmatpush.bf16.msra.mxu0 %v303
    %354 = vmatpush.bf16.msra.mxu0 %v301
    %355 = vmatpush.bf16.msra.mxu0 %v299
    %356 = vmatpush.bf16.msra.mxu0 %v297
    %357 = vmatpush.bf16.msra.mxu0 %v295
    %358 = vmatpush.bf16.msra.mxu0 %v293
    %359 = vmatpush.bf16.msra.mxu0 %v291
    %360 = vmatpush.bf16.msra.mxu0 %v289
    %361 = vmatmul.bf16.gmra.mxu0 %v153
    %v362 = vpop.f32.mrf.mxu0
    %v363 = vadd.f32 %v189, %v362
    %v364 = vpop.f32.mrf.mxu0
    %365 = vdwg.mxu0
    %366 = vmatpush.bf16.msra.mxu0 %v319
    %367 = vmatpush.bf16.msra.mxu0 %v317
    %368 = vmatpush.bf16.msra.mxu0 %v315
    %369 = vmatpush.bf16.msra.mxu0 %v313
    %370 = vmatpush.bf16.msra.mxu0 %v311
    %371 = vmatpush.bf16.msra.mxu0 %v309
    %372 = vmatpush.bf16.msra.mxu0 %v307
    %373 = vmatpush.bf16.msra.mxu0 %v305
    %374 = vmatmul.bf16.gmra.mxu0 %v154
    %v375 = vpop.f32.mrf.mxu0
    %v376 = vadd.f32 %v363, %v375
    %v377 = vpop.f32.mrf.mxu0
    %378 = vdwg.mxu0
    %379 = vmatpush.bf16.msra.mxu0 %v304
    %380 = vmatpush.bf16.msra.mxu0 %v302
    %381 = vmatpush.bf16.msra.mxu0 %v300
    %382 = vmatpush.bf16.msra.mxu0 %v298
    %383 = vmatpush.bf16.msra.mxu0 %v296
    %384 = vmatpush.bf16.msra.mxu0 %v294
    %385 = vmatpush.bf16.msra.mxu0 %v292
    %386 = vmatpush.bf16.msra.mxu0 %v290
    %387 = vmatmul.bf16.gmra.mxu0 %v153
    %v388 = vpop.f32.mrf.mxu0
    %v389 = vadd.f32 %v190, %v388
    %v390 = vpop.f32.mrf.mxu0
    %391 = vdwg.mxu0
    %392 = vmatpush.bf16.msra.mxu0 %v320
    %393 = vmatpush.bf16.msra.mxu0 %v318
    %394 = vmatpush.bf16.msra.mxu0 %v316
    %395 = vmatpush.bf16.msra.mxu0 %v314
    %396 = vmatpush.bf16.msra.mxu0 %v312
    %397 = vmatpush.bf16.msra.mxu0 %v310
    %398 = vmatpush.bf16.msra.mxu0 %v308
    %399 = vmatpush.bf16.msra.mxu0 %v306
    %400 = vmatmul.bf16.gmra.mxu0 %v154
    %v401 = vpop.f32.mrf.mxu0
    %v402 = vadd.f32 %v389, %v401
    %v403 = vpop.f32.mrf.mxu0
    %404 = vdwg.mxu0
    %v405 = vmax.f32 %v376, 0.0
    %v406 = vmax.f32 %v402, 0.0
    %v407 = vpack.c.bf16 %v405, %v405
    %v408 = vpack.c.bf16 %v406, %v406
    %v409 = vld [vmem:[#allocation10] sm:$0xf]
    %v410 = vld [vmem:[#allocation10 + $0x4] sm:$0xf]
    %v411 = vld [vmem:[#allocation10 + $0x8] sm:$0xf]
    %v412 = vld [vmem:[#allocation10 + $0xc] sm:$0xf]
    %v413 = vld [vmem:[#allocation10 + $0x10] sm:$0xf]
    %v414 = vld [vmem:[#allocation10 + $0x14] sm:$0xf]
    %v415 = vld [vmem:[#allocation10 + $0x18] sm:$0xf]
    %v416 = vld [vmem:[#allocation10 + $0x1c] sm:$0xf]
    %v417 = vld [vmem:[#allocation10 + $0x20] sm:$0xf]
    %v418 = vld [vmem:[#allocation10 + $0x24] sm:$0xf]
    %v419 = vld [vmem:[#allocation10 + $0x28] sm:$0xf]
    %v420 = vld [vmem:[#allocation10 + $0x2c] sm:$0xf]
    %v421 = vld [vmem:[#allocation10 + $0x30] sm:$0xf]
    %v422 = vld [vmem:[#allocation10 + $0x34] sm:$0xf]
    %v423 = vld [vmem:[#allocation10 + $0x38] sm:$0xf]
    %v424 = vld [vmem:[#allocation10 + $0x3c] sm:$0xf]
    %v425 = vld [vmem:[#allocation10 + $0x40] sm:$0xf]
    %v426 = vld [vmem:[#allocation10 + $0x44] sm:$0xf]
    %v427 = vld [vmem:[#allocation10 + $0x48] sm:$0xf]
    %v428 = vld [vmem:[#allocation10 + $0x4c] sm:$0xf]
    %v429 = vld [vmem:[#allocation10 + $0x50] sm:$0xf]
    %v430 = vld [vmem:[#allocation10 + $0x54] sm:$0xf]
    %v431 = vld [vmem:[#allocation10 + $0x58] sm:$0xf]
    %v432 = vld [vmem:[#allocation10 + $0x5c] sm:$0xf]
    %v433 = vld [vmem:[#allocation10 + $0x60] sm:$0xf]
    %v434 = vld [vmem:[#allocation10 + $0x64] sm:$0xf]
    %v435 = vld [vmem:[#allocation10 + $0x68] sm:$0xf]
    %v436 = vld [vmem:[#allocation10 + $0x6c] sm:$0xf]
    %v437 = vld [vmem:[#allocation10 + $0x70] sm:$0xf]
    %v438 = vld [vmem:[#allocation10 + $0x74] sm:$0xf]
    %v439 = vld [vmem:[#allocation10 + $0x78] sm:$0xf]
    %v440 = vld [vmem:[#allocation10 + $0x7c] sm:$0xf]
    %v441 = vld [vmem:[%s6] sm:$0x1]
    %v443 = vperm.slane %v441, 0
    %v477 = vunpack.c.l.b16 %v409
    %v478 = vunpack.c.l.b16 %v410
    %v479 = vunpack.c.l.b16 %v411
    %v480 = vunpack.c.l.b16 %v412
    %v481 = vunpack.c.l.b16 %v413
    %v482 = vunpack.c.l.b16 %v414
    %v483 = vunpack.c.l.b16 %v415
    %v484 = vunpack.c.l.b16 %v416
    %v485 = vunpack.c.l.b16 %v417
    %v486 = vunpack.c.l.b16 %v418
    %v487 = vunpack.c.l.b16 %v419
    %v488 = vunpack.c.l.b16 %v420
    %v489 = vunpack.c.l.b16 %v421
    %v490 = vunpack.c.l.b16 %v422
    %v491 = vunpack.c.l.b16 %v423
    %v492 = vunpack.c.l.b16 %v424
    %v493 = vunpack.c.l.b16 %v425
    %v494 = vunpack.c.l.b16 %v426
    %v495 = vunpack.c.l.b16 %v427
    %v496 = vunpack.c.l.b16 %v428
    %v497 = vunpack.c.l.b16 %v429
    %v498 = vunpack.c.l.b16 %v430
    %v499 = vunpack.c.l.b16 %v431
    %v500 = vunpack.c.l.b16 %v432
    %v501 = vunpack.c.l.b16 %v433
    %v502 = vunpack.c.l.b16 %v434
    %v503 = vunpack.c.l.b16 %v435
    %v504 = vunpack.c.l.b16 %v436
    %v505 = vunpack.c.l.b16 %v437
    %v506 = vunpack.c.l.b16 %v438
    %v507 = vunpack.c.l.b16 %v439
    %v508 = vunpack.c.l.b16 %v440
    %v509 = vpack.c.b16 %v478, %v477
    %v510 = vpack.c.b16 %v480, %v479
    %v511 = vpack.c.b16 %v482, %v481
    %v512 = vpack.c.b16 %v484, %v483
    %v513 = vpack.c.b16 %v486, %v485
    %v514 = vpack.c.b16 %v488, %v487
    %v515 = vpack.c.b16 %v490, %v489
    %v516 = vpack.c.b16 %v492, %v491
    %v517 = vpack.c.b16 %v494, %v493
    %v518 = vpack.c.b16 %v496, %v495
    %v519 = vpack.c.b16 %v498, %v497
    %v520 = vpack.c.b16 %v500, %v499
    %v521 = vpack.c.b16 %v502, %v501
    %v522 = vpack.c.b16 %v504, %v503
    %v523 = vpack.c.b16 %v506, %v505
    %v524 = vpack.c.b16 %v508, %v507
    %541 = vmatpush.bf16.msra.mxu0 %v516
    %542 = vmatpush.bf16.msra.mxu0 %v515
    %543 = vmatpush.bf16.msra.mxu0 %v514
    %544 = vmatpush.bf16.msra.mxu0 %v513
    %545 = vmatpush.bf16.msra.mxu0 %v512
    %546 = vmatpush.bf16.msra.mxu0 %v511
    %547 = vmatpush.bf16.msra.mxu0 %v510
    %548 = vmatpush.bf16.msra.mxu0 %v509
    %549 = vmatmul.bf16.gmra.mxu0 %v407
    %v550 = vpop.f32.mrf.mxu0
    %v551 = vadd.f32 %v443, %v550
    %v552 = vpop.f32.mrf.mxu0
    %553 = vdwg.mxu0
    %554 = vmatpush.bf16.msra.mxu0 %v524
    %555 = vmatpush.bf16.msra.mxu0 %v523
    %556 = vmatpush.bf16.msra.mxu0 %v522
    %557 = vmatpush.bf16.msra.mxu0 %v521
    %558 = vmatpush.bf16.msra.mxu0 %v520
    %559 = vmatpush.bf16.msra.mxu0 %v519
    %560 = vmatpush.bf16.msra.mxu0 %v518
    %561 = vmatpush.bf16.msra.mxu0 %v517
    %562 = vmatmul.bf16.gmra.mxu0 %v408
    %v563 = vpop.f32.mrf.mxu0
    %v564 = vadd.f32 %v551, %v563
    %v565 = vpop.f32.mrf.mxu0
    %566 = vdwg.mxu0
    %v567 = vtanh.pop %v564
    %568 = vst [vmem:[#allocation11] sm:$0xff] %v567
    // Predicated region
    $region50: #{tpu_custom_call.1} parent=1 // pred_check
      _
    $region51: #{tpu_custom_call.1} parent=1 // pred_check_branch
      %570 = sbr.rel (0) target = $region53
    $region52: #{tpu_custom_call.1} parent=1 // pred_region
      %572 = vsyncadd [#allocation4], 0
      %s574 = sshll.u32 [#allocation11], 4
      %s575 = int_to_ptr.vmem [resolvable:$true] %s574
      %s576 = sshll.u32 %s7, 4
      %s577 = int_to_ptr.hbm [resolvable:$true] %s576
      %579 = dma.vmem_to_hbm [thread:$0]  %s575, 128, %s577, [#allocation4]
    $region53: #{tpu_custom_call.1} parent=1 // pred_fallthru
      _
    // Predicated region
    $region54: #{tpu_custom_call.1} parent=1 // pred_check
      _
    $region55: #{tpu_custom_call.1} parent=1 // pred_check_branch
      %581 = sbr.rel (0) target = $region57
    $region56: #{tpu_custom_call.1} parent=1 // pred_region
      %583 = dma.done [#allocation4], 128
    $region57: #{tpu_custom_call.1} parent=1 // pred_fallthru
      _
    %584 = vsyncpa [#allocation3], 1
    %585 = vsyncpa [#allocation6], 1
    %586 = vsyncpa [#allocation9], 1
    %587 = vsyncpa [#allocation4], 1

</llo_original>
